<compile_context>
chip_gen: v7x
topology: tpu7x:2x2x1
jax: 0.10.0
libtpu: 0.0.40
codegen_flags: <defaults>
</compile_context>

<pallas_src>
import jax
import jax.numpy as jnp
from jax.experimental import pallas as pl
from jax.experimental.pallas import tpu as pltpu


def _upsample1d_kernel(x_ref, halo_ref, w12_ref, w3_ref, w0_ref, b_ref, o_ref):
    # x_ref    : (1, LT, C)    input rows x[t0 : t0+LT]            (auto-pipelined)
    # halo_ref : (1, 1, 2, C)  [x[t0-1], x[t0+LT]] (zeros at edges) (auto-pipelined)
    # w12_ref  : (C, 2C) bf16  [W1 | W2]  (multiplies x[m])
    # w3_ref   : (C, C)  bf16  W3         (multiplies x[m-1] -> even half)
    # w0_ref   : (C, C)  bf16  W0         (multiplies x[m+1] -> odd half)
    # b_ref    : (1, 2C) f32   [bias | bias]
    # o_ref    : (1, LT, 2C)   lane-dense output; row m = [y[2m] | y[2m+1]]
    lt = x_ref.shape[1]
    c = x_ref.shape[2]

    x = x_ref[0].astype(jnp.bfloat16)                           # (LT, C)
    halo = halo_ref[...].reshape(2, c).astype(jnp.bfloat16)     # (2, C)
    left = halo[0:1, :]                                         # x[t0-1]
    right = halo[1:2, :]                                        # x[t0+LT]

    xm1 = jnp.concatenate([left, x[:-1, :]], axis=0)            # x[m-1]  (LT, C)
    xp1 = jnp.concatenate([x[1:, :], right], axis=0)            # x[m+1]  (LT, C)

    # Zero-free MXU work (f32 accumulation).
    y = jnp.dot(x, w12_ref[...], preferred_element_type=jnp.float32)        # (LT, 2C)
    y_even = jnp.dot(xm1, w3_ref[...], preferred_element_type=jnp.float32)  # (LT, C)
    y_odd = jnp.dot(xp1, w0_ref[...], preferred_element_type=jnp.float32)   # (LT, C)
    y = y + jnp.concatenate([y_even, y_odd], axis=1) + b_ref[...]

    o_ref[...] = y.reshape(1, lt, 2 * c).astype(o_ref.dtype)


def prepare_params(weight, bias):
    """Build zero-free bf16 weights and fused bias once (hoisted out of the
    per-call path). weight: (C_in, C_out, 4) PyTorch ConvTranspose1d layout."""
    c_in, c_out, k = weight.shape
    assert k == 4 and c_in == c_out
    w0, w1, w2, w3 = (weight[:, :, i] for i in range(4))
    w12 = jnp.concatenate([w1, w2], axis=1).astype(jnp.bfloat16)   # (C, 2C)
    w3b = w3.astype(jnp.bfloat16)                                  # (C, C)
    w0b = w0.astype(jnp.bfloat16)                                  # (C, C)
    b2 = jnp.concatenate([bias, bias]).reshape(1, 2 * c_out).astype(jnp.float32)
    return w12, w3b, w0b, b2


def _choose_l_tile(B, L, C, itemsize, target_bytes):
    """Pick an 8-aligned L tile near `target_bytes` per x block; if L has no
    decent aligned divisor, return a tile plus a padded L (never degrade to
    tiny tiles / one grid step per row)."""
    if L <= 8:
        return L, L
    rows = max(8, min(L, target_bytes // max(C * itemsize, 1)))
    if B == 1:
        rows = min(rows, max(8, (L // 16) * 8))   # keep >=2 L tiles for v7x's 2 TCs
    if rows < L:
        rows = max(8, (rows // 8) * 8)
    for d in range(min(rows, L), 7, -1):
        if L % d == 0 and (d % 8 == 0 or d == L):
            if 2 * d >= min(rows, L):
                return d, L
            break
    lt = max(8, (rows // 8) * 8)
    return lt, pl.cdiv(L, lt) * lt


def upsample1d_nlc(x_blc, w12, w3, w0, b2, *, l_tile=None,
                   target_block_bytes=2 << 20):
    """Channels-last entry point. x_blc: (B, L, C); returns (B, 2L, C) in the
    same dtype as x (pass bf16 to halve HBM traffic — this op is HBM-bound)."""
    B, L, C = x_blc.shape
    in_itemsize = jnp.dtype(x_blc.dtype).itemsize

    if l_tile is None:
        l_tile, Lp = _choose_l_tile(B, L, C, in_itemsize, target_block_bytes)
    else:
        assert l_tile % 8 == 0 or l_tile == L, l_tile
        Lp = pl.cdiv(L, l_tile) * l_tile
    if Lp != L:
        x_blc = jnp.pad(x_blc, ((0, 0), (0, Lp - L), (0, 0)))  # zero rows = correct edge semantics
    num_l = Lp // l_tile

    # Halo rows x[t0-1] / x[t0+LT] per tile, gathered once on the XLA side so
    # they ride the auto-pipeline instead of per-step in-kernel DMAs.
    zrow = jnp.zeros((B, 1, C), x_blc.dtype)
    left = jnp.concatenate([zrow, x_blc[:, l_tile - 1:Lp - 1:l_tile, :]], axis=1)
    right = jnp.concatenate([x_blc[:, l_tile:Lp:l_tile, :], zrow], axis=1)
    halo = jnp.stack([left, right], axis=2)                     # (B, num_l, 2, C)

    out_dtype = x_blc.dtype
    out_itemsize = jnp.dtype(out_dtype).itemsize

    # VMEM budget (everything double-buffered by the pipeline) + headroom.
    blk_bytes = (l_tile * C * in_itemsize                 # x block
                 + 2 * C * in_itemsize                    # halo block
                 + l_tile * 2 * C * out_itemsize          # out block
                 + 8 * C * C * 2                          # bf16 weights
                 + 2 * C * 4)                             # bias
    vmem_limit = int(min(64 << 20, max(2 * blk_bytes + (2 << 20), 16 << 20)))
    # TODO(synk): at very large C, single-buffer the constant weight specs
    # (pipeline_mode=pl.Buffered(1)) to cut their VMEM footprint in half.

    cost = pl.CostEstimate(
        flops=8 * B * Lp * C * C,                         # zero-free useful MACs
        transcendentals=0,
        bytes_accessed=int(B * Lp * C * in_itemsize
                           + halo.size * in_itemsize
                           + B * Lp * 2 * C * out_itemsize
                           + 8 * C * C * 2 + 8 * C))

    y_l2c = pl.pallas_call(
        _upsample1d_kernel,
        out_shape=jax.ShapeDtypeStruct((B, Lp, 2 * C), out_dtype),
        grid_spec=pltpu.PrefetchScalarGridSpec(
            num_scalar_prefetch=0,
            grid=(B, num_l),
            in_specs=[
                pl.BlockSpec((1, l_tile, C), lambda b, l: (b, l, 0)),      # x tile
                pl.BlockSpec((1, 1, 2, C), lambda b, l: (b, l, 0, 0)),     # halo rows
                pl.BlockSpec((C, 2 * C), lambda b, l: (0, 0)),             # [W1|W2]
                pl.BlockSpec((C, C), lambda b, l: (0, 0)),                 # W3
                pl.BlockSpec((C, C), lambda b, l: (0, 0)),                 # W0
                pl.BlockSpec((1, 2 * C), lambda b, l: (0, 0)),             # bias
            ],
            out_specs=pl.BlockSpec((1, l_tile, 2 * C), lambda b, l: (b, l, 0)),
        ),
        compiler_params=pltpu.CompilerParams(
            dimension_semantics=("parallel", "parallel"),
            vmem_limit_bytes=vmem_limit),
        cost_estimate=cost,
    )(x_blc, halo, w12, w3, w0, b2)

    # (B, Lp, 2C) -> (B, 2Lp, C) is a free row-major reshape that yields the
    # interleaved [y[2m]; y[2m+1]] sequence; then drop any padded tail.
    y = y_l2c.reshape(B, 2 * Lp, C)
    if Lp != L:
        y = y[:, :2 * L, :]
    return y


def upsample1d(x_ncl, weight, bias, *, l_tile=None):
    """PyTorch-parity entry: x (B, C, L) -> (B, C, 2L).
    The transposes are layout plumbing only; a channels-last pipeline should
    call upsample1d_nlc(prepare_params(...)) directly and skip them."""
    w12, w3, w0, b2 = prepare_params(weight, bias)
    x_blc = jnp.transpose(x_ncl, (0, 2, 1))                  # (B, L, C)
    y_blc = upsample1d_nlc(x_blc, w12, w3, w0, b2, l_tile=l_tile)
    return jnp.transpose(y_blc, (0, 2, 1))                   # (B, C, 2L)
    # TODO(synk): on v5e, pad/pack C to a multiple of 128 at the model level to
    # avoid masked partial stores and low MXU utilization for small C.


def _reference(x_ncl, weight, bias):
    """Direct ConvTranspose1d(stride=2, pad=1, k=4) reference in plain JAX (f32)."""
    B, C, L = x_ncl.shape
    y = jnp.broadcast_to(bias[None, :, None], (B, C, 2 * L)).astype(jnp.float32)
    for k in range(4):
        for l in range(L):
            t = 2 * l - 1 + k
            if 0 <= t < 2 * L:
                contrib = jnp.einsum('bi,io->bo', x_ncl[:, :, l], weight[:, :, k])
                y = y.at[:, :, t].add(contrib)
    return y


if __name__ == "__main__":
    B, dim, L = 2, 8, 16

    key = jax.random.PRNGKey(0)
    kx, kw, kb = jax.random.split(key, 3)
    x = jax.random.normal(kx, (B, dim, L), dtype=jnp.float32)
    # ConvTranspose1d weight shape: (in_channels, out_channels, kernel_size)
    weight = 0.1 * jax.random.normal(kw, (dim, dim, 4), dtype=jnp.float32)
    bias = 0.1 * jax.random.normal(kb, (dim,), dtype=jnp.float32)

    # l_tile=8 -> two L tiles per batch element, exercising the halo path.
    y = upsample1d(x, weight, bias, l_tile=8)
    y = jax.block_until_ready(y)

    y_ref = _reference(x, weight, bias)
    assert y.shape == (B, dim, 2 * L), y.shape
    max_err = float(jnp.max(jnp.abs(y - y_ref)))
    # bf16 matmul inputs with f32 accumulation -> ~1e-3 level error expected.
    assert jnp.allclose(y, y_ref, atol=2e-2, rtol=2e-2), f"mismatch, max err {max_err}"

    print("KERNEL_OK")
</pallas_src>

<mosaic_0001>
module attributes {stable_mosaic.version = 11 : i64} {
  func.func @_upsample1d_kernel(%arg0: i32, %arg1: i32, %arg2: memref<1x8x8xf32, #tpu.memory_space<vmem>>, %arg3: memref<1x1x2x8xf32, #tpu.memory_space<vmem>>, %arg4: memref<8x16xbf16, #tpu.memory_space<vmem>>, %arg5: memref<8x8xbf16, #tpu.memory_space<vmem>>, %arg6: memref<8x8xbf16, #tpu.memory_space<vmem>>, %arg7: memref<1x16xf32, #tpu.memory_space<vmem>>, %arg8: memref<1x8x16xf32, #tpu.memory_space<vmem>>) attributes {dimension_semantics = [#tpu.dimension_semantics<parallel>, #tpu.dimension_semantics<parallel>], iteration_bounds = array<i64: 2, 2>, scalar_prefetch = 0 : i64, scratch_operands = 0 : i64, tpu.core_type = #tpu.core_type<tc>, window_params = [{transform_indices = @transform_0, window_bounds = array<i64: 1, 8, 8>}, {transform_indices = @transform_1, window_bounds = array<i64: 1, 1, 2, 8>}, {pipeline_mode = #tpu.pipeline_mode<synchronous>, transform_indices = @transform_2, window_bounds = array<i64: 8, 16>}, {pipeline_mode = #tpu.pipeline_mode<synchronous>, transform_indices = @transform_3, window_bounds = array<i64: 8, 8>}, {pipeline_mode = #tpu.pipeline_mode<synchronous>, transform_indices = @transform_4, window_bounds = array<i64: 8, 8>}, {pipeline_mode = #tpu.pipeline_mode<synchronous>, transform_indices = @transform_5, window_bounds = array<i64: 1, 16>}, {transform_indices = @transform_6, window_bounds = array<i64: 1, 8, 16>}]} {
    %c0 = arith.constant 0 : index
    %c0_0 = arith.constant 0 : index
    %c0_1 = arith.constant 0 : index
    %0 = vector.load %arg2[%c0, %c0_0, %c0_1] : memref<1x8x8xf32, #tpu.memory_space<vmem>>, vector<1x8x8xf32>
    %1 = vector.shape_cast %0 : vector<1x8x8xf32> to vector<8x8xf32>
    %2 = arith.truncf %1 : vector<8x8xf32> to vector<8x8xbf16>
    %c0_2 = arith.constant 0 : index
    %c0_3 = arith.constant 0 : index
    %c0_4 = arith.constant 0 : index
    %c0_5 = arith.constant 0 : index
    %3 = vector.load %arg3[%c0_2, %c0_3, %c0_4, %c0_5] : memref<1x1x2x8xf32, #tpu.memory_space<vmem>>, vector<1x1x2x8xf32>
    %4 = vector.shape_cast %3 : vector<1x1x2x8xf32> to vector<2x8xf32>
    %5 = arith.truncf %4 : vector<2x8xf32> to vector<2x8xbf16>
    %6 = vector.extract_strided_slice %5 {offsets = [0, 0], sizes = [1, 8], strides = [1, 1]} : vector<2x8xbf16> to vector<1x8xbf16>
    %7 = vector.extract_strided_slice %5 {offsets = [1, 0], sizes = [1, 8], strides = [1, 1]} : vector<2x8xbf16> to vector<1x8xbf16>
    %8 = vector.extract_strided_slice %2 {offsets = [0, 0], sizes = [7, 8], strides = [1, 1]} : vector<8x8xbf16> to vector<7x8xbf16>
    %9 = tpu.concatenate %6, %8 in 0 : vector<1x8xbf16>, vector<7x8xbf16> -> vector<8x8xbf16>
    %10 = vector.extract_strided_slice %2 {offsets = [1, 0], sizes = [7, 8], strides = [1, 1]} : vector<8x8xbf16> to vector<7x8xbf16>
    %11 = tpu.concatenate %10, %7 in 0 : vector<7x8xbf16>, vector<1x8xbf16> -> vector<8x8xbf16>
    %c0_6 = arith.constant 0 : index
    %c0_7 = arith.constant 0 : index
    %12 = vector.load %arg4[%c0_6, %c0_7] : memref<8x16xbf16, #tpu.memory_space<vmem>>, vector<8x16xbf16>
    %cst = arith.constant dense<0.000000e+00> : vector<8x16xf32>
    %13 = tpu.matmul %2, %12, %cst {dimension_numbers = #tpu.dot_dimension_numbers<[1], [0], [0], [1], [0, 0, 1, 1], [], []>} : vector<8x8xbf16>, vector<8x16xbf16>, vector<8x16xf32> -> vector<8x16xf32>
    %c0_8 = arith.constant 0 : index
    %c0_9 = arith.constant 0 : index
    %14 = vector.load %arg5[%c0_8, %c0_9] : memref<8x8xbf16, #tpu.memory_space<vmem>>, vector<8x8xbf16>
    %cst_10 = arith.constant dense<0.000000e+00> : vector<8x8xf32>
    %15 = tpu.matmul %9, %14, %cst_10 {dimension_numbers = #tpu.dot_dimension_numbers<[1], [0], [0], [1], [0, 0, 1, 1], [], []>} : vector<8x8xbf16>, vector<8x8xbf16>, vector<8x8xf32> -> vector<8x8xf32>
    %c0_11 = arith.constant 0 : index
    %c0_12 = arith.constant 0 : index
    %16 = vector.load %arg6[%c0_11, %c0_12] : memref<8x8xbf16, #tpu.memory_space<vmem>>, vector<8x8xbf16>
    %cst_13 = arith.constant dense<0.000000e+00> : vector<8x8xf32>
    %17 = tpu.matmul %11, %16, %cst_13 {dimension_numbers = #tpu.dot_dimension_numbers<[1], [0], [0], [1], [0, 0, 1, 1], [], []>} : vector<8x8xbf16>, vector<8x8xbf16>, vector<8x8xf32> -> vector<8x8xf32>
    %18 = tpu.concatenate %15, %17 in 1 : vector<8x8xf32>, vector<8x8xf32> -> vector<8x16xf32>
    %19 = arith.addf %13, %18 : vector<8x16xf32>
    %c0_14 = arith.constant 0 : index
    %c0_15 = arith.constant 0 : index
    %20 = vector.load %arg7[%c0_14, %c0_15] : memref<1x16xf32, #tpu.memory_space<vmem>>, vector<1x16xf32>
    %21 = vector.broadcast %20 : vector<1x16xf32> to vector<8x16xf32>
    %22 = arith.addf %19, %21 : vector<8x16xf32>
    %23 = vector.shape_cast %22 : vector<8x16xf32> to vector<1x8x16xf32>
    %c0_16 = arith.constant 0 : index
    %c0_17 = arith.constant 0 : index
    %c0_18 = arith.constant 0 : index
    %24 = vector.load %arg8[%c0_16, %c0_17, %c0_18] : memref<1x8x16xf32, #tpu.memory_space<vmem>>, vector<1x8x16xf32>
    tpu.vector_store %arg8[%c0_16, %c0_17, %c0_18], %23 {strides = array<i32>} : memref<1x8x16xf32, #tpu.memory_space<vmem>>, vector<1x8x16xf32>,
    return
  }
  func.func @transform_0(%arg0: i32, %arg1: i32) -> (i32, i32, i32) {
    %c0_i32 = arith.constant 0 : i32
    %c0_i32_0 = arith.constant 0 : i32
    return %arg0, %arg1, %c0_i32 : i32, i32, i32
  }
  func.func @transform_1(%arg0: i32, %arg1: i32) -> (i32, i32, i32, i32) {
    %c0_i32 = arith.constant 0 : i32
    %c0_i32_0 = arith.constant 0 : i32
    %c0_i32_1 = arith.constant 0 : i32
    return %arg0, %arg1, %c0_i32, %c0_i32_0 : i32, i32, i32, i32
  }
  func.func @transform_2(%arg0: i32, %arg1: i32) -> (i32, i32) {
    %c0_i32 = arith.constant 0 : i32
    %c0_i32_0 = arith.constant 0 : i32
    %c0_i32_1 = arith.constant 0 : i32
    return %c0_i32, %c0_i32_0 : i32, i32
  }
  func.func @transform_3(%arg0: i32, %arg1: i32) -> (i32, i32) {
    %c0_i32 = arith.constant 0 : i32
    %c0_i32_0 = arith.constant 0 : i32
    %c0_i32_1 = arith.constant 0 : i32
    return %c0_i32, %c0_i32_0 : i32, i32
  }
  func.func @transform_4(%arg0: i32, %arg1: i32) -> (i32, i32) {
    %c0_i32 = arith.constant 0 : i32
    %c0_i32_0 = arith.constant 0 : i32
    %c0_i32_1 = arith.constant 0 : i32
    return %c0_i32, %c0_i32_0 : i32, i32
  }
  func.func @transform_5(%arg0: i32, %arg1: i32) -> (i32, i32) {
    %c0_i32 = arith.constant 0 : i32
    %c0_i32_0 = arith.constant 0 : i32
    %c0_i32_1 = arith.constant 0 : i32
    return %c0_i32, %c0_i32_0 : i32, i32
  }
  func.func @transform_6(%arg0: i32, %arg1: i32) -> (i32, i32, i32) {
    %c0_i32 = arith.constant 0 : i32
    %c0_i32_0 = arith.constant 0 : i32
    return %arg0, %arg1, %c0_i32 : i32, i32, i32
  }
}

</mosaic_0001>

<llo_original>
// kernel: tpu_custom_call.1
$region0: #{tpu_custom_call.1}
  #allocation0 [shape = 'u32[]', space=smem, size = 0x4, offset = 0x4, fixed_abs, tag = 'smem constant byte address 0x4 - core index']
  #allocation1 [shape = 'u32[144,128]{1,0:T(1,128)}', space=vmem, size = 0x12000, scoped, tag = 'internal scratch']
  %s0 = inlined_call_operand.vmem [shape: f32[2,16,8], index: 0, kind: input, shape index: {}]
  %s1 = inlined_call_operand.vmem [shape: f32[2,2,2,8], index: 1, kind: input, shape index: {}]
  %s2 = inlined_call_operand.vmem [shape: bf16[8,16], index: 2, kind: input, shape index: {}]
  %s3 = inlined_call_operand.vmem [shape: bf16[8,8], index: 3, kind: input, shape index: {}]
  %s4 = inlined_call_operand.vmem [shape: bf16[8,8], index: 4, kind: input, shape index: {}]
  %s5 = inlined_call_operand.vmem [shape: f32[1,16], index: 5, kind: input, shape index: {}]
  %s6 = inlined_call_operand.hbm [shape: f32[2,16,16], index: 6, kind: output, shape index: {}]
  %s7 = sld [smem:[#allocation0]]
  $region57: #{tpu_custom_call.1} parent=0
    _
  %s9 = ssub.s32 1, %s7
  %s10 = scalar_select 0, %s9, %s7
  $region1: #{tpu_custom_call.1} parent=0
    #allocation2 [shape = 'u8[8192]{0}', space=vmem, size = 0x2000, scoped, tag = 'output window, operand 0']
    #allocation3 [shape = 's32[2]{0}', space=sflag, size = 0x8, scoped, tag = 'scoped memory for tpu_custom_call.1']
    %11 = vsyncpa [#allocation3], 0
    %s12 = scalar_lea.sflag [#allocation3], 1
    %13 = vsyncpa %s12, 0
    loop: start=0, step=1, limit=6
    $region2: #{tpu_custom_call.1} parent=1 // loop_pre_header
      _
    $region3: #{tpu_custom_call.1} parent=1 // loop_header
      %s15 = sphi 0, %s19
      %p16 = scmp.ge.s32.totalorder %s15, 6
      %s22 = sphi 0, %s34
      %s23 = sphi 0, %s30
      %s24 = sphi 0, %s22
      %s25 = sphi 0, %s23
      %s26 = sphi 0, %s24
      %s27 = sphi 0, %s25
      %s39 = sphi 0, %s41
      %s42 = sphi 0, %s39
      %s43 = sphi 0, %s42
      %s59 = sphi 0, %s43
      %s67 = sphi 0, %s69
      %s70 = sphi 0, %s67
      %s71 = sphi 0, %s70
      %s87 = sphi 0, %s71
      %s91 = sphi 0, %s91
      %s93 = sphi 0, %s91
      %s94 = sphi 0, %s93
      %s108 = sphi 0, %s94
      %s112 = sphi 0, %s112
      %s114 = sphi 0, %s112
      %s115 = sphi 0, %s114
      %s129 = sphi 0, %s115
      %s133 = sphi 0, %s133
      %s135 = sphi 0, %s133
      %s136 = sphi 0, %s135
      %s150 = sphi 0, %s136
      %s154 = sphi 0, %s154
      %s156 = sphi 0, %s154
      %s157 = sphi 0, %s156
      %s171 = sphi 0, %s157
      %s179 = sphi 0, %s181
      %s182 = sphi 0, %s179
      %s183 = sphi 0, %s182
      %s199 = sphi 0, %s183
    $region4: #{tpu_custom_call.1} parent=1 // loop_header_branch
      %18 = sbr.rel (%p16) target = $region8
    $region5: #{tpu_custom_call.1} parent=1 // loop_body
      %s20 = ssub.s32 %s15, 1
      %s21 = ssub.s32 %s15, 2
      %s28 = sadd.s32 1, %s23
      %p29 = scmp.ge.s32.totalorder %s28, 2
      %s30 = scalar_select %p29, 0, %s28
      %s31 = sadd.s32 1, %s22
      %s32 = scalar_select %p29, %s31, %s22
      %p33 = scmp.ge.s32.totalorder %s32, 2
      %s34 = scalar_select %p33, 0, %s32
      %s35 = ssub.s32 %s22, %s34
      %s36 = ssub.s32 %s23, %s30
      %s37 = sor.u32 %s35, %s36
      %p38 = scmp.eq.s32.totalorder %s37, 0
      %s40 = sadd.s32 %s39, 1
      %s41 = scalar_select %p38, %s39, %s40
      %p44 = pneg %p38
      %p45 = scmp.eq.s32.totalorder %s15, 3
      %p46 = por %p44, %p45
      %p47 = scmp.ne.s32.totalorder %s39, %s42
      %p48 = scmp.eq.s32.totalorder %s15, 0
      %p49 = por %p47, %p48
      %p50 = scmp.ne.s32.totalorder %s39, %s42
      %p51 = scmp.eq.s32.totalorder %s20, 3
      %p52 = por %p50, %p51
      %p53 = scmp.ne.s32.totalorder %s42, %s43
      %p54 = scmp.eq.s32.totalorder %s20, 0
      %p55 = por %p53, %p54
      %p56 = scmp.ne.s32.totalorder %s42, %s43
      %p57 = scmp.eq.s32.totalorder %s21, 3
      %p58 = por %p56, %p57
      %p60 = scmp.ne.s32.totalorder %s43, %s59
      %p61 = scmp.eq.s32.totalorder %s21, 0
      %p62 = por %p60, %p61
      %s63 = ssub.s32 %s22, %s34
      %s64 = ssub.s32 %s23, %s30
      %s65 = sor.u32 %s63, %s64
      %p66 = scmp.eq.s32.totalorder %s65, 0
      %s68 = sadd.s32 %s67, 1
      %s69 = scalar_select %p66, %s67, %s68
      %p72 = pneg %p66
      %p73 = scmp.eq.s32.totalorder %s15, 3
      %p74 = por %p72, %p73
      %p75 = scmp.ne.s32.totalorder %s67, %s70
      %p76 = scmp.eq.s32.totalorder %s15, 0
      %p77 = por %p75, %p76
      %p78 = scmp.ne.s32.totalorder %s67, %s70
      %p79 = scmp.eq.s32.totalorder %s20, 3
      %p80 = por %p78, %p79
      %p81 = scmp.ne.s32.totalorder %s70, %s71
      %p82 = scmp.eq.s32.totalorder %s20, 0
      %p83 = por %p81, %p82
      %p84 = scmp.ne.s32.totalorder %s70, %s71
      %p85 = scmp.eq.s32.totalorder %s21, 3
      %p86 = por %p84, %p85
      %p88 = scmp.ne.s32.totalorder %s71, %s87
      %p89 = scmp.eq.s32.totalorder %s21, 0
      %p90 = por %p88, %p89
      %s92 = sadd.s32 %s91, 1
      %p95 = scmp.eq.s32.totalorder %s15, 3
      %p96 = scmp.ne.s32.totalorder %s91, %s93
      %p97 = scmp.eq.s32.totalorder %s15, 0
      %p98 = por %p96, %p97
      %p99 = scmp.ne.s32.totalorder %s91, %s93
      %p100 = scmp.eq.s32.totalorder %s20, 3
      %p101 = por %p99, %p100
      %p102 = scmp.ne.s32.totalorder %s93, %s94
      %p103 = scmp.eq.s32.totalorder %s20, 0
      %p104 = por %p102, %p103
      %p105 = scmp.ne.s32.totalorder %s93, %s94
      %p106 = scmp.eq.s32.totalorder %s21, 3
      %p107 = por %p105, %p106
      %p109 = scmp.ne.s32.totalorder %s94, %s108
      %p110 = scmp.eq.s32.totalorder %s21, 0
      %p111 = por %p109, %p110
      %s113 = sadd.s32 %s112, 1
      %p116 = scmp.eq.s32.totalorder %s15, 3
      %p117 = scmp.ne.s32.totalorder %s112, %s114
      %p118 = scmp.eq.s32.totalorder %s15, 0
      %p119 = por %p117, %p118
      %p120 = scmp.ne.s32.totalorder %s112, %s114
      %p121 = scmp.eq.s32.totalorder %s20, 3
      %p122 = por %p120, %p121
      %p123 = scmp.ne.s32.totalorder %s114, %s115
      %p124 = scmp.eq.s32.totalorder %s20, 0
      %p125 = por %p123, %p124
      %p126 = scmp.ne.s32.totalorder %s114, %s115
      %p127 = scmp.eq.s32.totalorder %s21, 3
      %p128 = por %p126, %p127
      %p130 = scmp.ne.s32.totalorder %s115, %s129
      %p131 = scmp.eq.s32.totalorder %s21, 0
      %p132 = por %p130, %p131
      %s134 = sadd.s32 %s133, 1
      %p137 = scmp.eq.s32.totalorder %s15, 3
      %p138 = scmp.ne.s32.totalorder %s133, %s135
      %p139 = scmp.eq.s32.totalorder %s15, 0
      %p140 = por %p138, %p139
      %p141 = scmp.ne.s32.totalorder %s133, %s135
      %p142 = scmp.eq.s32.totalorder %s20, 3
      %p143 = por %p141, %p142
      %p144 = scmp.ne.s32.totalorder %s135, %s136
      %p145 = scmp.eq.s32.totalorder %s20, 0
      %p146 = por %p144, %p145
      %p147 = scmp.ne.s32.totalorder %s135, %s136
      %p148 = scmp.eq.s32.totalorder %s21, 3
      %p149 = por %p147, %p148
      %p151 = scmp.ne.s32.totalorder %s136, %s150
      %p152 = scmp.eq.s32.totalorder %s21, 0
      %p153 = por %p151, %p152
      %s155 = sadd.s32 %s154, 1
      %p158 = scmp.eq.s32.totalorder %s15, 3
      %p159 = scmp.ne.s32.totalorder %s154, %s156
      %p160 = scmp.eq.s32.totalorder %s15, 0
      %p161 = por %p159, %p160
      %p162 = scmp.ne.s32.totalorder %s154, %s156
      %p163 = scmp.eq.s32.totalorder %s20, 3
      %p164 = por %p162, %p163
      %p165 = scmp.ne.s32.totalorder %s156, %s157
      %p166 = scmp.eq.s32.totalorder %s20, 0
      %p167 = por %p165, %p166
      %p168 = scmp.ne.s32.totalorder %s156, %s157
      %p169 = scmp.eq.s32.totalorder %s21, 3
      %p170 = por %p168, %p169
      %p172 = scmp.ne.s32.totalorder %s157, %s171
      %p173 = scmp.eq.s32.totalorder %s21, 0
      %p174 = por %p172, %p173
      %s175 = ssub.s32 %s22, %s34
      %s176 = ssub.s32 %s23, %s30
      %s177 = sor.u32 %s175, %s176
      %p178 = scmp.eq.s32.totalorder %s177, 0
      %s180 = sadd.s32 %s179, 1
      %s181 = scalar_select %p178, %s179, %s180
      %p184 = pneg %p178
      %p185 = scmp.eq.s32.totalorder %s15, 3
      %p186 = por %p184, %p185
      %p187 = scmp.ne.s32.totalorder %s179, %s182
      %p188 = scmp.eq.s32.totalorder %s15, 0
      %p189 = por %p187, %p188
      %p190 = scmp.ne.s32.totalorder %s179, %s182
      %p191 = scmp.eq.s32.totalorder %s20, 3
      %p192 = por %p190, %p191
      %p193 = scmp.ne.s32.totalorder %s182, %s183
      %p194 = scmp.eq.s32.totalorder %s20, 0
      %p195 = por %p193, %p194
      %p196 = scmp.ne.s32.totalorder %s182, %s183
      %p197 = scmp.eq.s32.totalorder %s21, 3
      %p198 = por %p196, %p197
      %p200 = scmp.ne.s32.totalorder %s183, %s199
      %p201 = scmp.eq.s32.totalorder %s21, 0
      %p202 = por %p200, %p201
      %p203 = scmp.le.s32.totalorder 1, %s15
      %p204 = scmp.lt.s32.totalorder %s15, 5
      %p205 = pnand %p203, %p204
      %p206 = pneg %p205
      // Predicated region
      $region9: #{tpu_custom_call.1} parent=5 // pred_check
        _
      $region10: #{tpu_custom_call.1} parent=5 // pred_check_branch
        %208 = sbr.rel (%p205) target = $region12
      $region11: #{tpu_custom_call.1} parent=5 // pred_region
        %s209 = ssub.s32 %s15, 1
        // Predicated region
        $region13: #{tpu_custom_call.1} parent=11 // pred_check
          %p210 = pneg %p104
        $region14: #{tpu_custom_call.1} parent=11 // pred_check_branch
          %212 = sbr.rel (%p210) target = $region16
        $region15: #{tpu_custom_call.1} parent=11 // pred_region
          _
        $region16: #{tpu_custom_call.1} parent=11 // pred_fallthru
          _
        // Predicated region
        $region17: #{tpu_custom_call.1} parent=11 // pred_check
          %p213 = pneg %p125
        $region18: #{tpu_custom_call.1} parent=11 // pred_check_branch
          %215 = sbr.rel (%p213) target = $region20
        $region19: #{tpu_custom_call.1} parent=11 // pred_region
          _
        $region20: #{tpu_custom_call.1} parent=11 // pred_fallthru
          _
        // Predicated region
        $region21: #{tpu_custom_call.1} parent=11 // pred_check
          %p216 = pneg %p146
        $region22: #{tpu_custom_call.1} parent=11 // pred_check_branch
          %218 = sbr.rel (%p216) target = $region24
        $region23: #{tpu_custom_call.1} parent=11 // pred_region
          _
        $region24: #{tpu_custom_call.1} parent=11 // pred_fallthru
          _
        // Predicated region
        $region25: #{tpu_custom_call.1} parent=11 // pred_check
          %p219 = pneg %p167
        $region26: #{tpu_custom_call.1} parent=11 // pred_check_branch
          %221 = sbr.rel (%p219) target = $region28
        $region27: #{tpu_custom_call.1} parent=11 // pred_region
          _
        $region28: #{tpu_custom_call.1} parent=11 // pred_fallthru
          _
      $region12: #{tpu_custom_call.1} parent=5 // pred_fallthru
        _
      %p222 = scmp.lt.s32.totalorder %s15, 4
      // Predicated region
      $region29: #{tpu_custom_call.1} parent=5 // pred_check
        %p223 = pneg %p222
      $region30: #{tpu_custom_call.1} parent=5 // pred_check_branch
        %225 = sbr.rel (%p223) target = $region32
      $region31: #{tpu_custom_call.1} parent=5 // pred_region
        // Predicated region
        $region33: #{tpu_custom_call.1} parent=31 // pred_check
          %p226 = pneg %p49
        $region34: #{tpu_custom_call.1} parent=31 // pred_check_branch
          %228 = sbr.rel (%p226) target = $region36
        $region35: #{tpu_custom_call.1} parent=31 // pred_region
          %p229 = scmp.lt.s32.totalorder %s22, 1
          %s230 = scalar_select %p229, %s22, 1
          %p231 = scmp.lt.s32.totalorder %s23, 1
          %s232 = scalar_select %p231, %s23, 1
          %s233 = smul.addr %s230, 2
          %s234 = sadd.s32 %s232, %s233
          %s235 = smul.addr %s234, 8
          %s236 = scalar_lea.vmem %s0, %s235
        $region36: #{tpu_custom_call.1} parent=31 // pred_fallthru
          _
        // Predicated region
        $region37: #{tpu_custom_call.1} parent=31 // pred_check
          %p237 = pneg %p77
        $region38: #{tpu_custom_call.1} parent=31 // pred_check_branch
          %239 = sbr.rel (%p237) target = $region40
        $region39: #{tpu_custom_call.1} parent=31 // pred_region
          %p240 = scmp.lt.s32.totalorder %s22, 1
          %s241 = scalar_select %p240, %s22, 1
          %p242 = scmp.lt.s32.totalorder %s23, 1
          %s243 = scalar_select %p242, %s23, 1
          %s244 = smul.addr %s241, 2
          %s245 = sadd.s32 %s243, %s244
          %s246 = smul.addr %s245, 2
          %s247 = scalar_lea.vmem %s1, %s246
        $region40: #{tpu_custom_call.1} parent=31 // pred_fallthru
          _
      $region32: #{tpu_custom_call.1} parent=5 // pred_fallthru
        _
      %p248 = scmp.le.s32.totalorder 1, %s15
      %p249 = scmp.lt.s32.totalorder %s15, 5
      %p250 = pnand %p248, %p249
      %p251 = pneg %p250
      // Predicated region
      $region41: #{tpu_custom_call.1} parent=5 // pred_check
        _
      $region42: #{tpu_custom_call.1} parent=5 // pred_check_branch
        %253 = sbr.rel (%p250) target = $region44
      $region43: #{tpu_custom_call.1} parent=5 // pred_region
        %s254 = ssub.s32 %s15, 1
        %p255 = scmp.lt.s32.totalorder %s24, 1
        %s256 = scalar_select %p255, %s24, 1
        %p257 = scmp.lt.s32.totalorder %s25, 1
        %s258 = scalar_select %p257, %s25, 1
        %s259 = smul.addr %s256, 2
        %s260 = sadd.s32 %s258, %s259
        %s261 = smul.addr %s260, 8
        %s262 = scalar_lea.vmem %s0, %s261
        %p263 = pneg %p55
        %p264 = pneg %p52
        %p265 = scmp.lt.s32.totalorder %s24, 1
        %s266 = scalar_select %p265, %s24, 1
        %p267 = scmp.lt.s32.totalorder %s25, 1
        %s268 = scalar_select %p267, %s25, 1
        %s269 = smul.addr %s266, 2
        %s270 = sadd.s32 %s268, %s269
        %s271 = smul.addr %s270, 2
        %s272 = scalar_lea.vmem %s1, %s271
        %p273 = pneg %p83
        %p274 = pneg %p80
        %p275 = pneg %p104
        %p276 = pneg %p101
        %p277 = pneg %p125
        %p278 = pneg %p122
        %p279 = pneg %p146
        %p280 = pneg %p143
        %p281 = pneg %p167
        %p282 = pneg %p164
        %p283 = pneg %p195
        %p284 = pneg %p192
        %s285 = sand.u32 %s182, 1
        %s286 = scalar_lea.sflag [#allocation3], %s285
        %s287 = sand.u32 %s182, 1
        %s288 = smul.addr %s287, 8
        %s289 = scalar_lea.vmem [#allocation2], %s288
        %p290 = scmp.lt.s32.totalorder %s24, 1
        %s291 = scalar_select %p290, %s24, 1
        %p292 = scmp.lt.s32.totalorder %s25, 1
        %s293 = scalar_select %p292, %s25, 1
        %s294 = smul.addr %s291, 2
        %s295 = sadd.s32 %s293, %s294
        %s296 = smul.addr %s295, 8
        %s297 = scalar_lea.vmem %s0, %s296
        %p298 = scmp.lt.s32.totalorder %s24, 1
        %s299 = scalar_select %p298, %s24, 1
        %p300 = scmp.lt.s32.totalorder %s25, 1
        %s301 = scalar_select %p300, %s25, 1
        %s302 = smul.addr %s299, 2
        %s303 = sadd.s32 %s301, %s302
        %s304 = smul.addr %s303, 2
        %s305 = scalar_lea.vmem %s1, %s304
        %v307 = vld [vmem:[%s297] sm:$0xff]
        %v308 = vpack.c.bf16 %v307, %v307
        %v309 = vld [vmem:[%s305] sm:$0x3]
        %v310 = vpack.c.bf16 %v309, %v309
        %v312 = vshrl.u32 %v308, 16
        %v314 = vrot.slane %v312, 7
        %v315 = vshll.u32 %v308, 16
        %v317 = vor.u32 %v314, %v315
        %vm319 = vcmask 1040384
        %vm320 = vsmask.f32 256
        %vm321 = vmand %vm319, %vm320
        %v322 = vsel %vm321, %v310, %v317
        %v323 = vrot.slane %v315, 1
        %v324 = vor.u32 %v312, %v323
        %v327 = vrot.slane %v310, 5
        %vm329 = vcmask 1043456
        %vm330 = vsmask.f32 3328
        %vm331 = vmand %vm329, %vm330
        %v332 = vsel %vm331, %v324, %v327
        %v333 = vld [vmem:[%s2] sm:$0xf]
        %v334 = vld [vmem:[%s3] sm:$0xf]
        %vm335 = vcmask 64512
        %v337 = vsel %vm335, %v322, 0
        %vm339 = vcmask 1043456
        %v341 = vsel %vm339, %v334, 0
        %343 = vmatprep.subr.bf16.mxu0 0
        %344 = vmatpush1.bf16.msra.mxu0 %v341
        %345 = vmatprep.subr.bf16.mxu0 0
        %346 = vmatpush1.bf16.msra.mxu0 0
        %347 = vmatprep.subr.bf16.mxu0 0
        %348 = vmatpush1.bf16.msra.mxu0 0
        %349 = vmatprep.subr.bf16.mxu0 0
        %350 = vmatpush1.bf16.msra.mxu0 0
        %351 = vmatprep.subr.bf16.mxu0 0
        %352 = vmatpush1.bf16.msra.mxu0 0
        %353 = vmatprep.subr.bf16.mxu0 0
        %354 = vmatpush1.bf16.msra.mxu0 0
        %355 = vmatprep.subr.bf16.mxu0 0
        %356 = vmatpush1.bf16.msra.mxu0 0
        %357 = vmatprep.subr.bf16.mxu0 0
        %358 = vmatpush1.bf16.msra.mxu0 0
        %359 = vmatprep.subr.bf16.mxu0 0
        %360 = vmatpush1.bf16.msra.mxu0 0
        %361 = vmatprep.subr.bf16.mxu0 0
        %362 = vmatpush1.bf16.msra.mxu0 0
        %363 = vmatprep.subr.bf16.mxu0 0
        %364 = vmatpush1.bf16.msra.mxu0 0
        %365 = vmatprep.subr.bf16.mxu0 0
        %366 = vmatpush1.bf16.msra.mxu0 0
        %367 = vmatprep.subr.bf16.mxu0 0
        %368 = vmatpush1.bf16.msra.mxu0 0
        %369 = vmatprep.subr.bf16.mxu0 0
        %370 = vmatpush1.bf16.msra.mxu0 0
        %371 = vmatprep.subr.bf16.mxu0 0
        %372 = vmatpush1.bf16.msra.mxu0 0
        %373 = vmatprep.subr.bf16.mxu0 0
        %374 = vmatpush1.bf16.msra.mxu0 0
        %375 = vmatprep.mubr.bf16.mxu0 0
        %376 = vmatmul.mubr.bf16.gmra.mrb[0].mxu0 %v337
        %v377 = vpop.f32.mrb[0].mxu0
        %v378 = vadd.f32 0.0, %v377
        %v379 = vpop.f32.mrb[0].mxu0
        %v380 = vpop.f32.mrb[0].mxu0
        %v381 = vpop.f32.mrb[0].mxu0
        %382 = vdwg.mxu0
        %v383 = vld [vmem:[%s4] sm:$0xf]
        %v385 = vsel %vm335, %v332, 0
        %v388 = vsel %vm339, %v383, 0
        %390 = vmatprep.subr.bf16.mxu0 0
        %391 = vmatpush1.bf16.msra.mxu0 %v388
        %392 = vmatprep.subr.bf16.mxu0 0
        %393 = vmatpush1.bf16.msra.mxu0 0
        %394 = vmatprep.subr.bf16.mxu0 0
        %395 = vmatpush1.bf16.msra.mxu0 0
        %396 = vmatprep.subr.bf16.mxu0 0
        %397 = vmatpush1.bf16.msra.mxu0 0
        %398 = vmatprep.subr.bf16.mxu0 0
        %399 = vmatpush1.bf16.msra.mxu0 0
        %400 = vmatprep.subr.bf16.mxu0 0
        %401 = vmatpush1.bf16.msra.mxu0 0
        %402 = vmatprep.subr.bf16.mxu0 0
        %403 = vmatpush1.bf16.msra.mxu0 0
        %404 = vmatprep.subr.bf16.mxu0 0
        %405 = vmatpush1.bf16.msra.mxu0 0
        %406 = vmatprep.subr.bf16.mxu0 0
        %407 = vmatpush1.bf16.msra.mxu0 0
        %408 = vmatprep.subr.bf16.mxu0 0
        %409 = vmatpush1.bf16.msra.mxu0 0
        %410 = vmatprep.subr.bf16.mxu0 0
        %411 = vmatpush1.bf16.msra.mxu0 0
        %412 = vmatprep.subr.bf16.mxu0 0
        %413 = vmatpush1.bf16.msra.mxu0 0
        %414 = vmatprep.subr.bf16.mxu0 0
        %415 = vmatpush1.bf16.msra.mxu0 0
        %416 = vmatprep.subr.bf16.mxu0 0
        %417 = vmatpush1.bf16.msra.mxu0 0
        %418 = vmatprep.subr.bf16.mxu0 0
        %419 = vmatpush1.bf16.msra.mxu0 0
        %420 = vmatprep.subr.bf16.mxu0 0
        %421 = vmatpush1.bf16.msra.mxu0 0
        %422 = vmatprep.mubr.bf16.mxu0 0
        %423 = vmatmul.mubr.bf16.gmra.mrb[0].mxu0 %v385
        %v424 = vpop.f32.mrb[0].mxu0
        %v425 = vadd.f32 0.0, %v424
        %v426 = vpop.f32.mrb[0].mxu0
        %v427 = vpop.f32.mrb[0].mxu0
        %v428 = vpop.f32.mrb[0].mxu0
        %429 = vdwg.mxu0
        %431 = vrot.lane.b32.xlu0 %v425, 8
        %v432 = vpop.permute.xlu0 %431
        %v434 = vsel %vm335, %v378, %v432
        %v435 = vsel %vm335, %v308, 0
        %v438 = vsel %vm339, %v333, 0
        %440 = vmatprep.subr.bf16.mxu0 0
        %441 = vmatpush1.bf16.msra.mxu0 %v438
        %442 = vmatprep.subr.bf16.mxu0 0
        %443 = vmatpush1.bf16.msra.mxu0 0
        %444 = vmatprep.subr.bf16.mxu0 0
        %445 = vmatpush1.bf16.msra.mxu0 0
        %446 = vmatprep.subr.bf16.mxu0 0
        %447 = vmatpush1.bf16.msra.mxu0 0
        %448 = vmatprep.subr.bf16.mxu0 0
        %449 = vmatpush1.bf16.msra.mxu0 0
        %450 = vmatprep.subr.bf16.mxu0 0
        %451 = vmatpush1.bf16.msra.mxu0 0
        %452 = vmatprep.subr.bf16.mxu0 0
        %453 = vmatpush1.bf16.msra.mxu0 0
        %454 = vmatprep.subr.bf16.mxu0 0
        %455 = vmatpush1.bf16.msra.mxu0 0
        %456 = vmatprep.subr.bf16.mxu0 0
        %457 = vmatpush1.bf16.msra.mxu0 0
        %458 = vmatprep.subr.bf16.mxu0 0
        %459 = vmatpush1.bf16.msra.mxu0 0
        %460 = vmatprep.subr.bf16.mxu0 0
        %461 = vmatpush1.bf16.msra.mxu0 0
        %462 = vmatprep.subr.bf16.mxu0 0
        %463 = vmatpush1.bf16.msra.mxu0 0
        %464 = vmatprep.subr.bf16.mxu0 0
        %465 = vmatpush1.bf16.msra.mxu0 0
        %466 = vmatprep.subr.bf16.mxu0 0
        %467 = vmatpush1.bf16.msra.mxu0 0
        %468 = vmatprep.subr.bf16.mxu0 0
        %469 = vmatpush1.bf16.msra.mxu0 0
        %470 = vmatprep.subr.bf16.mxu0 0
        %471 = vmatpush1.bf16.msra.mxu0 0
        %472 = vmatprep.mubr.bf16.mxu0 0
        %473 = vmatmul.mubr.bf16.gmra.mrb[0].mxu0 %v435
        %v474 = vpop.f32.mrb[0].mxu0
        %v475 = vadd.f32 %v434, %v474
        %v476 = vpop.f32.mrb[0].mxu0
        %v477 = vpop.f32.mrb[0].mxu0
        %v478 = vpop.f32.mrb[0].mxu0
        %479 = vdwg.mxu0
        %v480 = vld [vmem:[%s5] sm:$0x1]
        %v482 = vlaneseq
        %v483 = vshrl.u32 %v482, 7
        %v484 = vsub.s32 0, %v483
        %v485 = vrot.slane %v480, %v484
        %v487 = vadd.f32 %v475, %v485
        %vm488 = vcmask 130048
        %489 = vst.msk [vmem:[%s289] sm:$0xff] %vm488, %v487
        %s490 = sand.u32 %s182, 1
        %s491 = scalar_lea.sflag [#allocation3], %s490
        %s492 = sand.u32 %s182, 1
        %s493 = smul.addr %s492, 8
        %s494 = scalar_lea.vmem [#allocation2], %s493
        // Predicated region
        $region45: #{tpu_custom_call.1} parent=43 // pred_check
          %p495 = pneg %p192
        $region46: #{tpu_custom_call.1} parent=43 // pred_check_branch
          %497 = sbr.rel (%p495) target = $region48
        $region47: #{tpu_custom_call.1} parent=43 // pred_region
          %s499 = ssub.s32 128, 128
          %500 = vsyncadd %s491, %s499
          %s501 = smul.addr %s24, 2
          %s502 = sadd.s32 %s25, %s501
          %s503 = smul.addr %s502, 128
          %s504 = scalar_lea.hbm %s6, %s503
          %s506 = sshll.u32 %s494, 4
          %s507 = int_to_ptr.vmem [resolvable:$true] %s506
          %509 = dma.vmem_to_hbm [thread:$0]  %s507, 128, %s504, %s491
        $region48: #{tpu_custom_call.1} parent=43 // pred_fallthru
          _
      $region44: #{tpu_custom_call.1} parent=5 // pred_fallthru
        _
      %p510 = scmp.le.s32.totalorder 2, %s15
      // Predicated region
      $region49: #{tpu_custom_call.1} parent=5 // pred_check
        %p511 = pneg %p510
      $region50: #{tpu_custom_call.1} parent=5 // pred_check_branch
        %513 = sbr.rel (%p511) target = $region52
      $region51: #{tpu_custom_call.1} parent=5 // pred_region
        %s514 = ssub.s32 %s15, 2
        // Predicated region
        $region53: #{tpu_custom_call.1} parent=51 // pred_check
          %p515 = pneg %p198
        $region54: #{tpu_custom_call.1} parent=51 // pred_check_branch
          %517 = sbr.rel (%p515) target = $region56
        $region55: #{tpu_custom_call.1} parent=51 // pred_region
          %s518 = sand.u32 %s183, 1
          %s519 = scalar_lea.sflag [#allocation3], %s518
          %s520 = sand.u32 %s183, 1
          %s521 = smul.addr %s520, 8
          %s522 = scalar_lea.vmem [#allocation2], %s521
          %523 = dma.done %s519, 128
        $region56: #{tpu_custom_call.1} parent=51 // pred_fallthru
          _
      $region52: #{tpu_custom_call.1} parent=5 // pred_fallthru
        _
    $region6: #{tpu_custom_call.1} parent=1 // loop_footer
      %s19 = sadd.s32 1, %s15
    $region7: #{tpu_custom_call.1} parent=1 // loop_footer_branch
      %14 = sbr.rel target = $region3
    $region8: #{tpu_custom_call.1} parent=1 // loop_exit
      _
    %524 = vsyncpa [#allocation3], 1
    %s525 = scalar_lea.sflag [#allocation3], 1
    %526 = vsyncpa %s525, 1

</llo_original>
